<compile_context>
chip_gen: v7x
topology: tpu7x:2x2x1
jax: 0.10.0
libtpu: 0.0.40
codegen_flags: <defaults>
</compile_context>

<pallas_src>
import functools

import jax
import jax.numpy as jnp
from jax.experimental import pallas as pl
from jax.experimental.pallas import tpu as pltpu


def _deconv_matmul_kernel(xs_ref, w_ref, y_ref, psum_ref, psq_ref, *, Lh, TH, Wp):
    """One grid step = one (batch element, output-row tile).

    xs_ref : (1, 1, D, (TH+Lh-1)*Wp)   folded input slab (contraction-major)
    w_ref  : (Lh, Ceff, D)             folded ConvTranspose2d weight
    y_ref  : (1, Ceff, TH*Wp)          conv output tile (pre-BN), lane-dense
    psum_ref / psq_ref : (1, 1, Ceff, 128) f32 per-tile partial BN statistics
    """
    slab = xs_ref[0, 0]                                  # (D, (TH+Lh-1)*Wp)
    span = TH * Wp
    # Single deep matmul for stride 2 (Lh == 1); short accumulation loop over the
    # remaining row taps for stride 1 (Lh == K).
    off0 = (Lh - 1) * Wp
    acc = jnp.dot(w_ref[0], slab[:, off0:off0 + span],
                  preferred_element_type=jnp.float32)
    for lh in range(1, Lh):
        off = (Lh - 1 - lh) * Wp
        acc += jnp.dot(w_ref[lh], slab[:, off:off + span],
                       preferred_element_type=jnp.float32)
    y_ref[0] = acc.astype(y_ref.dtype)
    # Lane-dense (width 128) per-tile BN partials, from the f32 accumulator.
    stat_shape = psum_ref.shape[2:]
    psum_ref[0, 0] = jnp.broadcast_to(
        jnp.sum(acc, axis=1, keepdims=True), stat_shape)
    psq_ref[0, 0] = jnp.broadcast_to(
        jnp.sum(acc * acc, axis=1, keepdims=True), stat_shape)


def _pick_row_tile(Hp, Wp, row_bytes, target_lanes=16384, vmem_budget=12 << 20):
    """Largest divisor TH of Hp whose tile is lane-aligned and within budget."""
    best = None
    for th in range(1, Hp + 1):
        if Hp % th:
            continue
        if (th * Wp) % 128 != 0 and th != Hp:
            continue
        if th * Wp <= target_lanes and th * row_bytes <= vmem_budget:
            best = th
    if best is None:
        for th in range(1, Hp + 1):
            if Hp % th == 0 and ((th * Wp) % 128 == 0 or th == Hp):
                best = th
                break
    return best if best is not None else Hp


def deconv2d_forward(x_nchw, w_t, *, stride, relu=True, bn=True, eps=1e-5,
                     row_tile=None, compute_dtype=jnp.bfloat16):
    """Forward pass of Deconv2d (default bn=True path of the PyTorch module)."""
    assert stride in (1, 2)
    N, Cin, H, W = x_nchw.shape
    cin_w, Cout, KH, KW = w_t.shape
    assert cin_w == Cin and KH == KW
    K = KH

    if not bn:
        # Module quirk: with bn=False the PyTorch forward returns relu(x) (the
        # *input*); the ConvTranspose2d output is discarded entirely.
        return jnp.maximum(x_nchw, 0.0) if relu else x_nchw

    xb = x_nchw.astype(compute_dtype)
    wb = w_t.astype(compute_dtype)

    if stride == 2:
        # Sub-pixel decomposition (output-phase):
        #   y[n,co,2i+ph,2j+pw] = sum_{mh,mw,ci} x[n,ci,i-mh,j-mw] *
        #                                        w[ci,co,2mh+ph,2mw+pw]
        # All 4 phases read identical input windows, so phases fold into the
        # output-channel dim and (mh,mw,ci) fold into the contraction dim.
        # The PyTorch crop y[:, :, :2H, :2W] falls out for free.
        Ph = Pw = 2
        Mh = Mw = (K + 1) // 2
        Hp, Wp = H, W                        # per-phase output extent
        Ho, Wo = 2 * H, 2 * W
        Lh = 1                               # all row taps folded into the slab
        D = Mh * Mw * Cin
        x_pad = jnp.pad(xb, ((0, 0), (0, 0), (Mh - 1, 0), (Mw - 1, 0)))
        pieces = [x_pad[:, :, Mh - 1 - mh:Mh - 1 - mh + Hp,
                        Mw - 1 - mw:Mw - 1 - mw + Wp]
                  for mh in range(Mh) for mw in range(Mw)]
        xfold = jnp.concatenate(pieces, axis=1)          # (N, D, Hp, Wp)
        # Weight -> (1, 4*Cout, Mh*Mw*Cin); taps with 2m+p >= K are zero-padded.
        w_pad = jnp.pad(wb, ((0, 0), (0, 0), (0, 2 * Mh - K), (0, 2 * Mw - K)))
        w_fold = (w_pad.reshape(Cin, Cout, Mh, 2, Mw, 2)
                  .transpose(3, 5, 1, 2, 4, 0)
                  .reshape(1, Ph * Pw * Cout, D))
        Ceff = Ph * Pw * Cout
    else:
        # stride 1: full conv-transpose output.  Fold (kw, Cin) into the
        # contraction in glue; keep the K row taps as a short in-kernel
        # accumulation loop (avoids a K*K im2col blowup in HBM).
        Ph = Pw = 1
        Mh = Mw = K
        Ho, Wo = H + K - 1, W + K - 1
        Hp, Wp = Ho, Wo
        Lh = K
        D = Mw * Cin
        x_pad = jnp.pad(xb, ((0, 0), (0, 0), (K - 1, K - 1), (K - 1, K - 1)))
        pieces = [x_pad[:, :, :, Mw - 1 - mw:Mw - 1 - mw + Wp]
                  for mw in range(Mw)]
        xfold = jnp.concatenate(pieces, axis=1)          # (N, D, H+2K-2, Wp)
        w_fold = wb.transpose(2, 1, 3, 0).reshape(K, Cout, D)
        Ceff = Cout

    # y stream: bf16 only when its channel (sublane) dim is a full bf16 tile.
    y_dtype = compute_dtype if (Ceff % 16 == 0) else jnp.float32
    in_bytes = jnp.dtype(compute_dtype).itemsize
    y_bytes = jnp.dtype(y_dtype).itemsize

    if row_tile is None:
        row_bytes = 2 * Wp * (D * in_bytes + Ceff * y_bytes) + Wp * Ceff * 4
        row_tile = _pick_row_tile(Hp, Wp, row_bytes)
    TH = row_tile
    assert Hp % TH == 0 and ((TH * Wp) % 128 == 0 or TH == Hp)
    T = Hp // TH

    slab_cols = (TH + Lh - 1) * Wp
    if Lh == 1:
        # No row halo -> no extra materialisation: plain block indexing.
        xs = xfold.reshape(N, 1, D, Hp * Wp)
        xs_spec = pl.BlockSpec((1, 1, D, TH * Wp), lambda n, t: (n, 0, 0, t))
    else:
        # Row tiles with a (Lh-1)-row halo baked in so block indices stay plain.
        xs = jnp.stack([xfold[:, :, t * TH:t * TH + TH + Lh - 1, :]
                        for t in range(T)], axis=1).reshape(N, T, D, slab_cols)
        xs_spec = pl.BlockSpec((1, 1, D, slab_cols), lambda n, t: (n, t, 0, 0))

    kernel = functools.partial(_deconv_matmul_kernel, Lh=Lh, TH=TH, Wp=Wp)
    y_flat, psum, psq = pl.pallas_call(
        kernel,
        out_shape=(
            jax.ShapeDtypeStruct((N, Ceff, Hp * Wp), y_dtype),
            jax.ShapeDtypeStruct((N, T, Ceff, 128), jnp.float32),
            jax.ShapeDtypeStruct((N, T, Ceff, 128), jnp.float32),
        ),
        grid_spec=pltpu.PrefetchScalarGridSpec(
            num_scalar_prefetch=0,
            grid=(N, T),
            in_specs=[
                xs_spec,
                # Grid-invariant few-KiB weight: constant block index, fetched
                # once and kept resident by the pipeline.
                pl.BlockSpec((Lh, Ceff, D), lambda n, t: (0, 0, 0)),
            ],
            out_specs=[
                pl.BlockSpec((1, Ceff, TH * Wp), lambda n, t: (n, 0, t)),
                pl.BlockSpec((1, 1, Ceff, 128), lambda n, t: (n, t, 0, 0)),
                pl.BlockSpec((1, 1, Ceff, 128), lambda n, t: (n, t, 0, 0)),
            ],
        ),
        compiler_params=pltpu.CompilerParams(
            # Both axes independent -> v7x megacore can split the grid.
            dimension_semantics=("parallel", "parallel"),
            # 32 MiB keeps the working set safe on v7x (64 MiB physical VMEM);
            # raise it together with larger row tiles on v5e / v6e (128 MiB).
            vmem_limit_bytes=32 * 1024 * 1024),
    )(xs, w_fold)

    # BatchNorm2d training-mode batch statistics (biased var), gamma=1, beta=0.
    count = float(N * Ho * Wo)
    csum = psum[:, :, :, 0].sum(axis=(0, 1)).reshape(Ph * Pw, Cout).sum(axis=0)
    csq = psq[:, :, :, 0].sum(axis=(0, 1)).reshape(Ph * Pw, Cout).sum(axis=0)
    mean = csum / count
    var = jnp.maximum(csq / count - mean * mean, 0.0)
    scale = 1.0 / jnp.sqrt(var + eps)        # gamma = 1
    shift = -mean * scale                    # beta = 0

    # BN apply + ReLU (+ phase interleave for stride 2): purely memory bound;
    # fused by XLA into one read of y and one write of the NCHW output.
    # TODO(synk): fold this into a Pallas pass if the 5-D phase-interleave
    #             transpose must run on-chip.
    if stride == 2:
        y6 = y_flat.reshape(N, Ph, Pw, Cout, Hp, Wp).astype(jnp.float32)
        out = (y6 * scale[None, None, None, :, None, None]
               + shift[None, None, None, :, None, None])
        if relu:
            out = jnp.maximum(out, 0.0)
        out = out.transpose(0, 3, 4, 1, 5, 2).reshape(N, Cout, Ho, Wo)
    else:
        y4 = y_flat.reshape(N, Cout, Ho, Wo).astype(jnp.float32)
        out = y4 * scale[None, :, None, None] + shift[None, :, None, None]
        if relu:
            out = jnp.maximum(out, 0.0)
    return out


if __name__ == "__main__":
    key = jax.random.PRNGKey(0)
    k_x, k_w = jax.random.split(key)

    N, Cin, H, W = 2, 4, 16, 16
    Cout, K = 8, 3

    x = jax.random.normal(k_x, (N, Cin, H, W), jnp.float32)
    # deterministic xavier-uniform init of ConvTranspose2d weight (in, out, kH, kW)
    fan_in, fan_out = Cin * K * K, Cout * K * K
    bound = (6.0 / (fan_in + fan_out)) ** 0.5
    w_t = jax.random.uniform(k_w, (Cin, Cout, K, K), jnp.float32, -bound, bound)

    def reference(stride):
        # ConvTranspose2d == dilate + pad + flipped-kernel conv; same numerics
        # contract as the kernel (bf16 operands, f32 accumulation / BN math,
        # bf16-rounded y when the kernel stores y in bf16).
        xb = x.astype(jnp.bfloat16).astype(jnp.float32)
        wb = w_t.astype(jnp.bfloat16).astype(jnp.float32)
        Hd, Wd = (H - 1) * stride + 1, (W - 1) * stride + 1
        xd = jnp.zeros((N, Cin, Hd, Wd), jnp.float32
                       ).at[:, :, ::stride, ::stride].set(xb)
        xp = jnp.pad(xd, ((0, 0), (0, 0), (K - 1, K - 1), (K - 1, K - 1)))
        Ho, Wo = (2 * H, 2 * W) if stride == 2 else (H + K - 1, W + K - 1)
        wc = jnp.flip(wb, axis=(2, 3))                   # (Cin, Cout, K, K)
        y = jnp.zeros((N, Cout, Ho, Wo), jnp.float32)
        for kh in range(K):
            for kw in range(K):
                y = y + jnp.einsum('nchw,co->nohw',
                                   xp[:, :, kh:kh + Ho, kw:kw + Wo],
                                   wc[:, :, kh, kw])
        count = N * Ho * Wo
        mean = y.sum(axis=(0, 2, 3)) / count
        var = jnp.maximum((y * y).sum(axis=(0, 2, 3)) / count - mean * mean, 0.0)
        scale = 1.0 / jnp.sqrt(var + 1e-5)
        ceff = (4 if stride == 2 else 1) * Cout
        y_q = y.astype(jnp.bfloat16).astype(jnp.float32) if ceff % 16 == 0 else y
        out = (y_q - mean[None, :, None, None]) * scale[None, :, None, None]
        return jnp.maximum(out, 0.0)

    for stride in (2, 1):
        out = deconv2d_forward(x, w_t, stride=stride, relu=True, bn=True)
        out = jax.block_until_ready(out)
        Ho, Wo = (2 * H, 2 * W) if stride == 2 else (H + K - 1, W + K - 1)
        assert out.shape == (N, Cout, Ho, Wo), out.shape
        ref = reference(stride)
        max_err = float(jnp.max(jnp.abs(out - ref)))
        assert jnp.allclose(out, ref, rtol=2.5e-2, atol=2.5e-2), (stride, max_err)

    print("KERNEL_OK")
</pallas_src>

<mosaic_0001>
module attributes {stable_mosaic.version = 11 : i64} {
  func.func @_deconv_matmul_kernel(%arg0: i32, %arg1: i32, %arg2: memref<1x1x16x256xbf16, #tpu.memory_space<vmem>>, %arg3: memref<1x32x16xbf16, #tpu.memory_space<vmem>>, %arg4: memref<1x32x256xbf16, #tpu.memory_space<vmem>>, %arg5: memref<1x1x32x128xf32, #tpu.memory_space<vmem>>, %arg6: memref<1x1x32x128xf32, #tpu.memory_space<vmem>>) attributes {dimension_semantics = [#tpu.dimension_semantics<parallel>, #tpu.dimension_semantics<parallel>], iteration_bounds = array<i64: 2, 1>, scalar_prefetch = 0 : i64, scratch_operands = 0 : i64, tpu.core_type = #tpu.core_type<tc>, window_params = [{transform_indices = @transform_0, window_bounds = array<i64: 1, 1, 16, 256>}, {pipeline_mode = #tpu.pipeline_mode<synchronous>, transform_indices = @transform_1, window_bounds = array<i64: 1, 32, 16>}, {transform_indices = @transform_2, window_bounds = array<i64: 1, 32, 256>}, {transform_indices = @transform_3, window_bounds = array<i64: 1, 1, 32, 128>}, {transform_indices = @transform_4, window_bounds = array<i64: 1, 1, 32, 128>}]} {
    %c0 = arith.constant 0 : index
    %c0_0 = arith.constant 0 : index
    %c0_1 = arith.constant 0 : index
    %c0_2 = arith.constant 0 : index
    %0 = vector.load %arg2[%c0, %c0_0, %c0_1, %c0_2] : memref<1x1x16x256xbf16, #tpu.memory_space<vmem>>, vector<1x1x16x256xbf16>
    %1 = vector.shape_cast %0 : vector<1x1x16x256xbf16> to vector<16x256xbf16>
    %c0_3 = arith.constant 0 : index
    %c0_4 = arith.constant 0 : index
    %c0_5 = arith.constant 0 : index
    %2 = vector.load %arg3[%c0_3, %c0_4, %c0_5] : memref<1x32x16xbf16, #tpu.memory_space<vmem>>, vector<1x32x16xbf16>
    %3 = vector.shape_cast %2 : vector<1x32x16xbf16> to vector<32x16xbf16>
    %cst = arith.constant dense<0.000000e+00> : vector<32x256xf32>
    %4 = tpu.matmul %3, %1, %cst {dimension_numbers = #tpu.dot_dimension_numbers<[1], [0], [0], [1], [0, 0, 1, 1], [], []>} : vector<32x16xbf16>, vector<16x256xbf16>, vector<32x256xf32> -> vector<32x256xf32>
    %5 = arith.truncf %4 : vector<32x256xf32> to vector<32x256xbf16>
    %c0_6 = arith.constant 0 : index
    %c0_7 = arith.constant 0 : index
    %c0_8 = arith.constant 0 : index
    %6 = vector.load %arg4[%c0_6, %c0_7, %c0_8] : memref<1x32x256xbf16, #tpu.memory_space<vmem>>, vector<1x32x256xbf16>
    %7 = vector.shape_cast %6 : vector<1x32x256xbf16> to vector<32x256xbf16>
    %8 = vector.shape_cast %5 : vector<32x256xbf16> to vector<1x32x256xbf16>
    tpu.vector_store %arg4[%c0_6, %c0_7, %c0_8], %8 {strides = array<i32>} : memref<1x32x256xbf16, #tpu.memory_space<vmem>>, vector<1x32x256xbf16>,
    %cst_9 = arith.constant dense<0.000000e+00> : vector<32xf32>
    %9 = vector.multi_reduction <add>, %4, %cst_9 [1] : vector<32x256xf32> to vector<32xf32>
    %10 = vector.shape_cast %9 : vector<32xf32> to vector<32x1xf32>
    %11 = vector.shape_cast %10 : vector<32x1xf32> to vector<32x1xf32>
    %12 = vector.broadcast %11 : vector<32x1xf32> to vector<32x128xf32>
    %c0_10 = arith.constant 0 : index
    %c0_11 = arith.constant 0 : index
    %c0_12 = arith.constant 0 : index
    %c0_13 = arith.constant 0 : index
    %13 = vector.load %arg5[%c0_10, %c0_11, %c0_12, %c0_13] : memref<1x1x32x128xf32, #tpu.memory_space<vmem>>, vector<1x1x32x128xf32>
    %14 = vector.shape_cast %13 : vector<1x1x32x128xf32> to vector<32x128xf32>
    %15 = vector.shape_cast %12 : vector<32x128xf32> to vector<1x1x32x128xf32>
    tpu.vector_store %arg5[%c0_10, %c0_11, %c0_12, %c0_13], %15 {strides = array<i32>} : memref<1x1x32x128xf32, #tpu.memory_space<vmem>>, vector<1x1x32x128xf32>,
    %16 = arith.mulf %4, %4 : vector<32x256xf32>
    %cst_14 = arith.constant dense<0.000000e+00> : vector<32xf32>
    %17 = vector.multi_reduction <add>, %16, %cst_14 [1] : vector<32x256xf32> to vector<32xf32>
    %18 = vector.shape_cast %17 : vector<32xf32> to vector<32x1xf32>
    %19 = vector.shape_cast %18 : vector<32x1xf32> to vector<32x1xf32>
    %20 = vector.broadcast %19 : vector<32x1xf32> to vector<32x128xf32>
    %c0_15 = arith.constant 0 : index
    %c0_16 = arith.constant 0 : index
    %c0_17 = arith.constant 0 : index
    %c0_18 = arith.constant 0 : index
    %21 = vector.load %arg6[%c0_15, %c0_16, %c0_17, %c0_18] : memref<1x1x32x128xf32, #tpu.memory_space<vmem>>, vector<1x1x32x128xf32>
    %22 = vector.shape_cast %21 : vector<1x1x32x128xf32> to vector<32x128xf32>
    %23 = vector.shape_cast %20 : vector<32x128xf32> to vector<1x1x32x128xf32>
    tpu.vector_store %arg6[%c0_15, %c0_16, %c0_17, %c0_18], %23 {strides = array<i32>} : memref<1x1x32x128xf32, #tpu.memory_space<vmem>>, vector<1x1x32x128xf32>,
    return
  }
  func.func @transform_0(%arg0: i32, %arg1: i32) -> (i32, i32, i32, i32) {
    %c0_i32 = arith.constant 0 : i32
    %c0_i32_0 = arith.constant 0 : i32
    %c0_i32_1 = arith.constant 0 : i32
    return %arg0, %c0_i32, %c0_i32_0, %arg1 : i32, i32, i32, i32
  }
  func.func @transform_1(%arg0: i32, %arg1: i32) -> (i32, i32, i32) {
    %c0_i32 = arith.constant 0 : i32
    %c0_i32_0 = arith.constant 0 : i32
    %c0_i32_1 = arith.constant 0 : i32
    %c0_i32_2 = arith.constant 0 : i32
    return %c0_i32, %c0_i32_0, %c0_i32_1 : i32, i32, i32
  }
  func.func @transform_2(%arg0: i32, %arg1: i32) -> (i32, i32, i32) {
    %c0_i32 = arith.constant 0 : i32
    %c0_i32_0 = arith.constant 0 : i32
    return %arg0, %c0_i32, %arg1 : i32, i32, i32
  }
  func.func @transform_3(%arg0: i32, %arg1: i32) -> (i32, i32, i32, i32) {
    %c0_i32 = arith.constant 0 : i32
    %c0_i32_0 = arith.constant 0 : i32
    %c0_i32_1 = arith.constant 0 : i32
    return %arg0, %arg1, %c0_i32, %c0_i32_0 : i32, i32, i32, i32
  }
  func.func @transform_4(%arg0: i32, %arg1: i32) -> (i32, i32, i32, i32) {
    %c0_i32 = arith.constant 0 : i32
    %c0_i32_0 = arith.constant 0 : i32
    %c0_i32_1 = arith.constant 0 : i32
    return %arg0, %arg1, %c0_i32, %c0_i32_0 : i32, i32, i32, i32
  }
}

</mosaic_0001>

<llo_original>
// kernel: tpu_custom_call.1
$region0: #{tpu_custom_call.1}
  #allocation0 [shape = 'u32[]', space=smem, size = 0x4, offset = 0x4, fixed_abs, tag = 'smem constant byte address 0x4 - core index']
  #allocation1 [shape = 'u32[144,128]{1,0:T(1,128)}', space=vmem, size = 0x12000, scoped, tag = 'internal scratch']
  %s0 = inlined_call_operand.hbm [shape: bf16[2,1,16,256], index: 0, kind: input, shape index: {}]
  %s1 = inlined_call_operand.vmem [shape: bf16[1,32,16], index: 1, kind: input, shape index: {}]
  %s2 = inlined_call_operand.hbm [shape: bf16[2,32,256], index: 2, kind: output, shape index: {0}]
  %s3 = inlined_call_operand.hbm [shape: f32[2,1,32,128], index: 3, kind: output, shape index: {1}]
  %s4 = inlined_call_operand.hbm [shape: f32[2,1,32,128], index: 4, kind: output, shape index: {2}]
  %5 = xla_tuple %s2, %s3, %s4
  %s6 = sld [smem:[#allocation0]]
  $region61: #{tpu_custom_call.1} parent=0
    _
  %s8 = ssub.s32 1, %s6
  %s9 = scalar_select 0, %s8, %s6
  $region1: #{tpu_custom_call.1} parent=0
    #allocation2 [shape = 'u8[16384]{0}', space=vmem, size = 0x4000, scoped, tag = 'input window, operand 0']
    #allocation3 [shape = 's32[2]{0}', space=sflag, size = 0x8, scoped, tag = 'scoped memory for tpu_custom_call.1']
    #allocation4 [shape = 's32[2]{0}', space=sflag, size = 0x8, scoped, tag = 'scoped memory for tpu_custom_call.1']
    #allocation5 [shape = 'u8[32768]{0}', space=vmem, size = 0x8000, scoped, tag = 'output window, operand 0']
    #allocation6 [shape = 'u8[32768]{0}', space=vmem, size = 0x8000, scoped, tag = 'output window, operand 1']
    #allocation7 [shape = 's32[2]{0}', space=sflag, size = 0x8, scoped, tag = 'scoped memory for tpu_custom_call.1']
    #allocation8 [shape = 'u8[32768]{0}', space=vmem, size = 0x8000, scoped, tag = 'output window, operand 2']
    %10 = vsyncpa [#allocation3], 0
    %s11 = scalar_lea.sflag [#allocation3], 1
    %12 = vsyncpa %s11, 0
    %13 = vsyncpa [#allocation4], 0
    %s14 = scalar_lea.sflag [#allocation4], 1
    %15 = vsyncpa %s14, 0
    %16 = vsyncpa [#allocation7], 0
    %s17 = scalar_lea.sflag [#allocation7], 1
    %18 = vsyncpa %s17, 0
    loop: start=0, step=1, limit=4
    $region2: #{tpu_custom_call.1} parent=1 // loop_pre_header
      _
    $region3: #{tpu_custom_call.1} parent=1 // loop_header
      %s20 = sphi 0, %s24
      %p21 = scmp.ge.s32.totalorder %s20, 4
      %s27 = sphi 0, %s39
      %s28 = sphi 0, %s35
      %s29 = sphi 0, %s27
      %s30 = sphi 0, %s28
      %s31 = sphi 0, %s29
      %s32 = sphi 0, %s30
      %s44 = sphi 0, %s46
      %s47 = sphi 0, %s44
      %s48 = sphi 0, %s47
      %s64 = sphi 0, %s48
      %s68 = sphi 0, %s68
      %s70 = sphi 0, %s68
      %s71 = sphi 0, %s70
      %s85 = sphi 0, %s71
      %s93 = sphi 0, %s95
      %s96 = sphi 0, %s93
      %s97 = sphi 0, %s96
      %s113 = sphi 0, %s97
      %s121 = sphi 0, %s123
      %s124 = sphi 0, %s121
      %s125 = sphi 0, %s124
      %s141 = sphi 0, %s125
      %s149 = sphi 0, %s151
      %s152 = sphi 0, %s149
      %s153 = sphi 0, %s152
      %s169 = sphi 0, %s153
    $region4: #{tpu_custom_call.1} parent=1 // loop_header_branch
      %23 = sbr.rel (%p21) target = $region8
    $region5: #{tpu_custom_call.1} parent=1 // loop_body
      %s25 = ssub.s32 %s20, 1
      %s26 = ssub.s32 %s20, 2
      %s33 = sadd.s32 1, %s28
      %p34 = scmp.ge.s32.totalorder %s33, 1
      %s35 = scalar_select %p34, 0, %s33
      %s36 = sadd.s32 1, %s27
      %s37 = scalar_select %p34, %s36, %s27
      %p38 = scmp.ge.s32.totalorder %s37, 2
      %s39 = scalar_select %p38, 0, %s37
      %s40 = ssub.s32 %s27, %s39
      %s41 = ssub.s32 %s28, %s35
      %s42 = sor.u32 %s40, %s41
      %p43 = scmp.eq.s32.totalorder %s42, 0
      %s45 = sadd.s32 %s44, 1
      %s46 = scalar_select %p43, %s44, %s45
      %p49 = pneg %p43
      %p50 = scmp.eq.s32.totalorder %s20, 1
      %p51 = por %p49, %p50
      %p52 = scmp.ne.s32.totalorder %s44, %s47
      %p53 = scmp.eq.s32.totalorder %s20, 0
      %p54 = por %p52, %p53
      %p55 = scmp.ne.s32.totalorder %s44, %s47
      %p56 = scmp.eq.s32.totalorder %s25, 1
      %p57 = por %p55, %p56
      %p58 = scmp.ne.s32.totalorder %s47, %s48
      %p59 = scmp.eq.s32.totalorder %s25, 0
      %p60 = por %p58, %p59
      %p61 = scmp.ne.s32.totalorder %s47, %s48
      %p62 = scmp.eq.s32.totalorder %s26, 1
      %p63 = por %p61, %p62
      %p65 = scmp.ne.s32.totalorder %s48, %s64
      %p66 = scmp.eq.s32.totalorder %s26, 0
      %p67 = por %p65, %p66
      %s69 = sadd.s32 %s68, 1
      %p72 = scmp.eq.s32.totalorder %s20, 1
      %p73 = scmp.ne.s32.totalorder %s68, %s70
      %p74 = scmp.eq.s32.totalorder %s20, 0
      %p75 = por %p73, %p74
      %p76 = scmp.ne.s32.totalorder %s68, %s70
      %p77 = scmp.eq.s32.totalorder %s25, 1
      %p78 = por %p76, %p77
      %p79 = scmp.ne.s32.totalorder %s70, %s71
      %p80 = scmp.eq.s32.totalorder %s25, 0
      %p81 = por %p79, %p80
      %p82 = scmp.ne.s32.totalorder %s70, %s71
      %p83 = scmp.eq.s32.totalorder %s26, 1
      %p84 = por %p82, %p83
      %p86 = scmp.ne.s32.totalorder %s71, %s85
      %p87 = scmp.eq.s32.totalorder %s26, 0
      %p88 = por %p86, %p87
      %s89 = ssub.s32 %s27, %s39
      %s90 = ssub.s32 %s28, %s35
      %s91 = sor.u32 %s89, %s90
      %p92 = scmp.eq.s32.totalorder %s91, 0
      %s94 = sadd.s32 %s93, 1
      %s95 = scalar_select %p92, %s93, %s94
      %p98 = pneg %p92
      %p99 = scmp.eq.s32.totalorder %s20, 1
      %p100 = por %p98, %p99
      %p101 = scmp.ne.s32.totalorder %s93, %s96
      %p102 = scmp.eq.s32.totalorder %s20, 0
      %p103 = por %p101, %p102
      %p104 = scmp.ne.s32.totalorder %s93, %s96
      %p105 = scmp.eq.s32.totalorder %s25, 1
      %p106 = por %p104, %p105
      %p107 = scmp.ne.s32.totalorder %s96, %s97
      %p108 = scmp.eq.s32.totalorder %s25, 0
      %p109 = por %p107, %p108
      %p110 = scmp.ne.s32.totalorder %s96, %s97
      %p111 = scmp.eq.s32.totalorder %s26, 1
      %p112 = por %p110, %p111
      %p114 = scmp.ne.s32.totalorder %s97, %s113
      %p115 = scmp.eq.s32.totalorder %s26, 0
      %p116 = por %p114, %p115
      %s117 = ssub.s32 %s27, %s39
      %s118 = ssub.s32 %s28, %s35
      %s119 = sor.u32 %s117, %s118
      %p120 = scmp.eq.s32.totalorder %s119, 0
      %s122 = sadd.s32 %s121, 1
      %s123 = scalar_select %p120, %s121, %s122
      %p126 = pneg %p120
      %p127 = scmp.eq.s32.totalorder %s20, 1
      %p128 = por %p126, %p127
      %p129 = scmp.ne.s32.totalorder %s121, %s124
      %p130 = scmp.eq.s32.totalorder %s20, 0
      %p131 = por %p129, %p130
      %p132 = scmp.ne.s32.totalorder %s121, %s124
      %p133 = scmp.eq.s32.totalorder %s25, 1
      %p134 = por %p132, %p133
      %p135 = scmp.ne.s32.totalorder %s124, %s125
      %p136 = scmp.eq.s32.totalorder %s25, 0
      %p137 = por %p135, %p136
      %p138 = scmp.ne.s32.totalorder %s124, %s125
      %p139 = scmp.eq.s32.totalorder %s26, 1
      %p140 = por %p138, %p139
      %p142 = scmp.ne.s32.totalorder %s125, %s141
      %p143 = scmp.eq.s32.totalorder %s26, 0
      %p144 = por %p142, %p143
      %s145 = ssub.s32 %s27, %s39
      %s146 = ssub.s32 %s28, %s35
      %s147 = sor.u32 %s145, %s146
      %p148 = scmp.eq.s32.totalorder %s147, 0
      %s150 = sadd.s32 %s149, 1
      %s151 = scalar_select %p148, %s149, %s150
      %p154 = pneg %p148
      %p155 = scmp.eq.s32.totalorder %s20, 1
      %p156 = por %p154, %p155
      %p157 = scmp.ne.s32.totalorder %s149, %s152
      %p158 = scmp.eq.s32.totalorder %s20, 0
      %p159 = por %p157, %p158
      %p160 = scmp.ne.s32.totalorder %s149, %s152
      %p161 = scmp.eq.s32.totalorder %s25, 1
      %p162 = por %p160, %p161
      %p163 = scmp.ne.s32.totalorder %s152, %s153
      %p164 = scmp.eq.s32.totalorder %s25, 0
      %p165 = por %p163, %p164
      %p166 = scmp.ne.s32.totalorder %s152, %s153
      %p167 = scmp.eq.s32.totalorder %s26, 1
      %p168 = por %p166, %p167
      %p170 = scmp.ne.s32.totalorder %s153, %s169
      %p171 = scmp.eq.s32.totalorder %s26, 0
      %p172 = por %p170, %p171
      %p173 = scmp.le.s32.totalorder 1, %s20
      %p174 = scmp.lt.s32.totalorder %s20, 3
      %p175 = pnand %p173, %p174
      %p176 = pneg %p175
      // Predicated region
      $region9: #{tpu_custom_call.1} parent=5 // pred_check
        _
      $region10: #{tpu_custom_call.1} parent=5 // pred_check_branch
        %178 = sbr.rel (%p175) target = $region12
      $region11: #{tpu_custom_call.1} parent=5 // pred_region
        %s179 = ssub.s32 %s20, 1
        // Predicated region
        $region13: #{tpu_custom_call.1} parent=11 // pred_check
          %p180 = pneg %p81
        $region14: #{tpu_custom_call.1} parent=11 // pred_check_branch
          %182 = sbr.rel (%p180) target = $region16
        $region15: #{tpu_custom_call.1} parent=11 // pred_region
          _
        $region16: #{tpu_custom_call.1} parent=11 // pred_fallthru
          _
      $region12: #{tpu_custom_call.1} parent=5 // pred_fallthru
        _
      %p183 = scmp.lt.s32.totalorder %s20, 2
      // Predicated region
      $region17: #{tpu_custom_call.1} parent=5 // pred_check
        %p184 = pneg %p183
      $region18: #{tpu_custom_call.1} parent=5 // pred_check_branch
        %186 = sbr.rel (%p184) target = $region20
      $region19: #{tpu_custom_call.1} parent=5 // pred_region
        // Predicated region
        $region21: #{tpu_custom_call.1} parent=19 // pred_check
          %p187 = pneg %p54
        $region22: #{tpu_custom_call.1} parent=19 // pred_check_branch
          %189 = sbr.rel (%p187) target = $region24
        $region23: #{tpu_custom_call.1} parent=19 // pred_region
          %s190 = sand.u32 %s44, 1
          %s191 = scalar_lea.sflag [#allocation3], %s190
          %s192 = sand.u32 %s44, 1
          %s193 = smul.addr %s192, 16
          %s194 = scalar_lea.vmem [#allocation2], %s193
          %s195 = smul.u32 2, %s28
          %s197 = ssub.s32 256, 256
          %198 = vsyncadd %s191, %s197
          %s199 = smul.addr %s27, 4
          %s200 = sadd.s32 %s195, %s199
          %s201 = smul.addr %s200, 64
          %s202 = scalar_lea.hbm %s0, %s201
          %s203 = sshll.u32 %s194, 4
          %s204 = int_to_ptr.vmem [resolvable:$true] %s203
          %209 = dma.hbm_to_vmem [thread:$0]  %s202, 256, %s204, %s191, 128, 128, 8
        $region24: #{tpu_custom_call.1} parent=19 // pred_fallthru
          _
      $region20: #{tpu_custom_call.1} parent=5 // pred_fallthru
        _
      %p210 = scmp.le.s32.totalorder 1, %s20
      %p211 = scmp.lt.s32.totalorder %s20, 3
      %p212 = pnand %p210, %p211
      %p213 = pneg %p212
      // Predicated region
      $region25: #{tpu_custom_call.1} parent=5 // pred_check
        _
      $region26: #{tpu_custom_call.1} parent=5 // pred_check_branch
        %215 = sbr.rel (%p212) target = $region28
      $region27: #{tpu_custom_call.1} parent=5 // pred_region
        %s216 = ssub.s32 %s20, 1
        %s217 = sand.u32 %s47, 1
        %s218 = scalar_lea.sflag [#allocation3], %s217
        %s219 = sand.u32 %s47, 1
        %s220 = smul.addr %s219, 16
        %s221 = scalar_lea.vmem [#allocation2], %s220
        // Predicated region
        $region29: #{tpu_custom_call.1} parent=27 // pred_check
          %p222 = pneg %p60
        $region30: #{tpu_custom_call.1} parent=27 // pred_check_branch
          %224 = sbr.rel (%p222) target = $region32
        $region31: #{tpu_custom_call.1} parent=27 // pred_region
          %225 = dma.done %s218, 256
        $region32: #{tpu_custom_call.1} parent=27 // pred_fallthru
          _
        %s226 = sand.u32 %s47, 1
        %s227 = scalar_lea.sflag [#allocation3], %s226
        %s228 = sand.u32 %s47, 1
        %s229 = smul.addr %s228, 16
        %s230 = scalar_lea.vmem [#allocation2], %s229
        %p231 = pneg %p60
        %p232 = pneg %p57
        %p233 = pneg %p81
        %p234 = pneg %p78
        %p235 = pneg %p109
        %p236 = pneg %p106
        %s237 = sand.u32 %s96, 1
        %s238 = scalar_lea.sflag [#allocation4], %s237
        %s239 = sand.u32 %s96, 1
        %s240 = smul.addr %s239, 32
        %s241 = scalar_lea.vmem [#allocation5], %s240
        %p242 = pneg %p137
        %p243 = pneg %p134
        %s244 = sand.u32 %s25, 1
        %s245 = scalar_lea.sflag [#allocation7], %s244
        %s246 = sand.u32 %s124, 1
        %s247 = smul.addr %s246, 32
        %s248 = scalar_lea.vmem [#allocation6], %s247
        %p249 = pneg %p165
        %p250 = pneg %p162
        %s251 = sand.u32 %s25, 1
        %s252 = scalar_lea.sflag [#allocation7], %s251
        %s253 = sand.u32 %s152, 1
        %s254 = smul.addr %s253, 32
        %s255 = scalar_lea.vmem [#allocation8], %s254
        %s256 = smul.u32 2, %s30
        %s257 = smul.u32 2, %s30
        %v259 = vld [vmem:[%s221] sm:$0xff]
        %v260 = vld [vmem:[%s221 + $0x8] sm:$0xff]
        %v261 = vld [vmem:[%s1] sm:$0xf]
        %v262 = vld [vmem:[%s1 + $0x4] sm:$0xf]
        %v263 = vld [vmem:[%s1 + $0x8] sm:$0xf]
        %v264 = vld [vmem:[%s1 + $0xc] sm:$0xf]
        %v269 = vunpack.c.l.b16 %v261
        %v270 = vunpack.c.l.b16 %v262
        %v271 = vunpack.c.l.b16 %v263
        %v272 = vunpack.c.l.b16 %v264
        %v273 = vpack.c.b16 %v270, %v269
        %v274 = vpack.c.b16 %v272, %v271
        %v277 = vunpack.c.l.b16 %v259
        %v278 = vunpack.c.h.b16 %v259
        %v279 = vunpack.c.l.b16 %v260
        %v280 = vunpack.c.h.b16 %v260
        %v281 = vpack.c.b16 %v279, %v277
        %v282 = vpack.c.b16 %v280, %v278
        %vm285 = vcmask 130048
        %v287 = vsel %vm285, %v273, 0
        %v290 = vsel %vm285, %v274, 0
        %292 = vmatprep.subr.bf16.mxu0 %v282
        %293 = vmatpush1.bf16.msra.mxu0 %v281
        %294 = vmatprep.subr.bf16.mxu0 0
        %295 = vmatpush1.bf16.msra.mxu0 0
        %296 = vmatprep.subr.bf16.mxu0 0
        %297 = vmatpush1.bf16.msra.mxu0 0
        %298 = vmatprep.subr.bf16.mxu0 0
        %299 = vmatpush1.bf16.msra.mxu0 0
        %300 = vmatprep.subr.bf16.mxu0 0
        %301 = vmatpush1.bf16.msra.mxu0 0
        %302 = vmatprep.subr.bf16.mxu0 0
        %303 = vmatpush1.bf16.msra.mxu0 0
        %304 = vmatprep.subr.bf16.mxu0 0
        %305 = vmatpush1.bf16.msra.mxu0 0
        %306 = vmatprep.subr.bf16.mxu0 0
        %307 = vmatpush1.bf16.msra.mxu0 0
        %308 = vmatprep.subr.bf16.mxu0 0
        %309 = vmatpush1.bf16.msra.mxu0 0
        %310 = vmatprep.subr.bf16.mxu0 0
        %311 = vmatpush1.bf16.msra.mxu0 0
        %312 = vmatprep.subr.bf16.mxu0 0
        %313 = vmatpush1.bf16.msra.mxu0 0
        %314 = vmatprep.subr.bf16.mxu0 0
        %315 = vmatpush1.bf16.msra.mxu0 0
        %316 = vmatprep.subr.bf16.mxu0 0
        %317 = vmatpush1.bf16.msra.mxu0 0
        %318 = vmatprep.subr.bf16.mxu0 0
        %319 = vmatpush1.bf16.msra.mxu0 0
        %320 = vmatprep.subr.bf16.mxu0 0
        %321 = vmatpush1.bf16.msra.mxu0 0
        %322 = vmatprep.subr.bf16.mxu0 0
        %323 = vmatpush1.bf16.msra.mxu0 0
        %324 = vmatprep.mubr.bf16.mxu0 0
        %325 = vmatmul.mubr.bf16.gmra.mrb[0].mxu0 %v287
        %v326 = vpop.f32.mrb[0].mxu0
        %v327 = vadd.f32 0.0, %v326
        %v328 = vpop.f32.mrb[0].mxu0
        %v329 = vadd.f32 0.0, %v328
        %v330 = vpop.f32.mrb[0].mxu0
        %v331 = vadd.f32 0.0, %v330
        %v332 = vpop.f32.mrb[0].mxu0
        %v333 = vadd.f32 0.0, %v332
        %334 = vmatprep.mubr.bf16.mxu0 0
        %335 = vmatmul.mubr.bf16.gmra.mrb[0].mxu0 %v290
        %v336 = vpop.f32.mrb[0].mxu0
        %v337 = vadd.f32 0.0, %v336
        %v338 = vpop.f32.mrb[0].mxu0
        %v339 = vadd.f32 0.0, %v338
        %v340 = vpop.f32.mrb[0].mxu0
        %v341 = vadd.f32 0.0, %v340
        %v342 = vpop.f32.mrb[0].mxu0
        %v343 = vadd.f32 0.0, %v342
        %344 = vdwg.mxu0
        %v345 = vpack.c.bf16 %v331, %v327
        %v346 = vpack.c.bf16 %v333, %v329
        %v347 = vpack.c.bf16 %v341, %v337
        %v348 = vpack.c.bf16 %v343, %v339
        %v353 = vunpack.c.l.b16 %v345
        %v354 = vunpack.c.l.b16 %v346
        %v355 = vunpack.c.h.b16 %v345
        %v356 = vunpack.c.h.b16 %v346
        %v357 = vunpack.c.l.b16 %v347
        %v358 = vunpack.c.l.b16 %v348
        %v359 = vunpack.c.h.b16 %v347
        %v360 = vunpack.c.h.b16 %v348
        %v361 = vpack.c.b16 %v354, %v353
        %v362 = vpack.c.b16 %v356, %v355
        %v363 = vpack.c.b16 %v358, %v357
        %v364 = vpack.c.b16 %v360, %v359
        %369 = vst [vmem:[%s241] sm:$0xff] %v361
        %370 = vst [vmem:[%s241 + $0x8] sm:$0xff] %v362
        %371 = vst [vmem:[%s241 + $0x10] sm:$0xff] %v363
        %372 = vst [vmem:[%s241 + $0x18] sm:$0xff] %v364
        %v373 = vadd.f32 %v327, %v329
        %374 = vadd.xlane.f32.xlu0 %v373
        %v375 = vpop.xlane.xlu0 %374
        %v376 = vadd.f32 %v331, %v333
        %377 = vadd.xlane.f32.xlu0 %v376
        %v378 = vpop.xlane.xlu0 %377
        %v379 = vadd.f32 %v337, %v339
        %380 = vadd.xlane.f32.xlu0 %v379
        %v381 = vpop.xlane.xlu0 %380
        %v382 = vadd.f32 %v341, %v343
        %383 = vadd.xlane.f32.xlu0 %v382
        %v384 = vpop.xlane.xlu0 %383
        %385 = vst [vmem:[%s248] sm:$0xff] %v375
        %386 = vst [vmem:[%s248 + $0x8] sm:$0xff] %v378
        %387 = vst [vmem:[%s248 + $0x10] sm:$0xff] %v381
        %388 = vst [vmem:[%s248 + $0x18] sm:$0xff] %v384
        %v389 = vmul.f32 %v327, %v327
        %v390 = vmul.f32 %v329, %v329
        %v391 = vmul.f32 %v331, %v331
        %v392 = vmul.f32 %v333, %v333
        %v393 = vmul.f32 %v337, %v337
        %v394 = vmul.f32 %v339, %v339
        %v395 = vmul.f32 %v341, %v341
        %v396 = vmul.f32 %v343, %v343
        %v397 = vadd.f32 %v389, %v390
        %398 = vadd.xlane.f32.xlu0 %v397
        %v399 = vpop.xlane.xlu0 %398
        %v400 = vadd.f32 %v391, %v392
        %401 = vadd.xlane.f32.xlu0 %v400
        %v402 = vpop.xlane.xlu0 %401
        %v403 = vadd.f32 %v393, %v394
        %404 = vadd.xlane.f32.xlu0 %v403
        %v405 = vpop.xlane.xlu0 %404
        %v406 = vadd.f32 %v395, %v396
        %407 = vadd.xlane.f32.xlu0 %v406
        %v408 = vpop.xlane.xlu0 %407
        %409 = vst [vmem:[%s255] sm:$0xff] %v399
        %410 = vst [vmem:[%s255 + $0x8] sm:$0xff] %v402
        %411 = vst [vmem:[%s255 + $0x10] sm:$0xff] %v405
        %412 = vst [vmem:[%s255 + $0x18] sm:$0xff] %v408
        %s413 = sand.u32 %s96, 1
        %s414 = scalar_lea.sflag [#allocation4], %s413
        %s415 = sand.u32 %s96, 1
        %s416 = smul.addr %s415, 32
        %s417 = scalar_lea.vmem [#allocation5], %s416
        %s418 = sand.u32 %s25, 1
        %s419 = scalar_lea.sflag [#allocation7], %s418
        %s420 = sand.u32 %s124, 1
        %s421 = smul.addr %s420, 32
        %s422 = scalar_lea.vmem [#allocation6], %s421
        %s423 = sand.u32 %s25, 1
        %s424 = scalar_lea.sflag [#allocation7], %s423
        %s425 = sand.u32 %s152, 1
        %s426 = smul.addr %s425, 32
        %s427 = scalar_lea.vmem [#allocation8], %s426
        // Predicated region
        $region33: #{tpu_custom_call.1} parent=27 // pred_check
          %p428 = pneg %p106
        $region34: #{tpu_custom_call.1} parent=27 // pred_check_branch
          %430 = sbr.rel (%p428) target = $region36
        $region35: #{tpu_custom_call.1} parent=27 // pred_region
          %s431 = smul.u32 2, %s30
          %s433 = ssub.s32 512, 512
          %434 = vsyncadd %s414, %s433
          %s435 = smul.addr %s29, 8
          %s436 = sadd.s32 %s431, %s435
          %s437 = smul.addr %s436, 64
          %s438 = scalar_lea.hbm %s2, %s437
          %s439 = sshll.u32 %s417, 4
          %s440 = int_to_ptr.vmem [resolvable:$true] %s439
          %445 = dma.vmem_to_hbm [thread:$0]  %s440, 512, %s438, %s414, 128, 128, 8
        $region36: #{tpu_custom_call.1} parent=27 // pred_fallthru
          _
        // Predicated region
        $region37: #{tpu_custom_call.1} parent=27 // pred_check
          %p446 = pneg %p134
        $region38: #{tpu_custom_call.1} parent=27 // pred_check_branch
          %448 = sbr.rel (%p446) target = $region40
        $region39: #{tpu_custom_call.1} parent=27 // pred_region
          %s450 = ssub.s32 512, 512
          %451 = vsyncadd %s419, %s450
          %s452 = smul.addr %s30, 4
          %s453 = smul.addr %s29, 4
          %s454 = sadd.s32 %s452, %s453
          %s455 = smul.addr %s454, 128
          %s456 = scalar_lea.hbm %s3, %s455
          %s457 = sshll.u32 %s422, 4
          %s458 = int_to_ptr.vmem [resolvable:$true] %s457
          %463 = dma.vmem_to_hbm [thread:$0]  %s458, 512, %s456, %s419, 128, 128, 8
        $region40: #{tpu_custom_call.1} parent=27 // pred_fallthru
          _
        // Predicated region
        $region41: #{tpu_custom_call.1} parent=27 // pred_check
          %p464 = pneg %p162
        $region42: #{tpu_custom_call.1} parent=27 // pred_check_branch
          %466 = sbr.rel (%p464) target = $region44
        $region43: #{tpu_custom_call.1} parent=27 // pred_region
          %s468 = ssub.s32 512, 512
          %469 = vsyncadd %s424, %s468
          %s470 = smul.addr %s30, 4
          %s471 = smul.addr %s29, 4
          %s472 = sadd.s32 %s470, %s471
          %s473 = smul.addr %s472, 128
          %s474 = scalar_lea.hbm %s4, %s473
          %s475 = sshll.u32 %s427, 4
          %s476 = int_to_ptr.vmem [resolvable:$true] %s475
          %481 = dma.vmem_to_hbm [thread:$0]  %s476, 512, %s474, %s424, 128, 128, 8
        $region44: #{tpu_custom_call.1} parent=27 // pred_fallthru
          _
      $region28: #{tpu_custom_call.1} parent=5 // pred_fallthru
        _
      %p482 = scmp.le.s32.totalorder 2, %s20
      // Predicated region
      $region45: #{tpu_custom_call.1} parent=5 // pred_check
        %p483 = pneg %p482
      $region46: #{tpu_custom_call.1} parent=5 // pred_check_branch
        %485 = sbr.rel (%p483) target = $region48
      $region47: #{tpu_custom_call.1} parent=5 // pred_region
        %s486 = ssub.s32 %s20, 2
        // Predicated region
        $region49: #{tpu_custom_call.1} parent=47 // pred_check
          %p487 = pneg %p112
        $region50: #{tpu_custom_call.1} parent=47 // pred_check_branch
          %489 = sbr.rel (%p487) target = $region52
        $region51: #{tpu_custom_call.1} parent=47 // pred_region
          %s490 = sand.u32 %s97, 1
          %s491 = scalar_lea.sflag [#allocation4], %s490
          %s492 = sand.u32 %s97, 1
          %s493 = smul.addr %s492, 32
          %s494 = scalar_lea.vmem [#allocation5], %s493
          %495 = dma.done %s491, 512
        $region52: #{tpu_custom_call.1} parent=47 // pred_fallthru
          _
        // Predicated region
        $region53: #{tpu_custom_call.1} parent=47 // pred_check
          %p496 = pneg %p140
        $region54: #{tpu_custom_call.1} parent=47 // pred_check_branch
          %498 = sbr.rel (%p496) target = $region56
        $region55: #{tpu_custom_call.1} parent=47 // pred_region
          %s499 = sand.u32 %s26, 1
          %s500 = scalar_lea.sflag [#allocation7], %s499
          %s501 = sand.u32 %s125, 1
          %s502 = smul.addr %s501, 32
          %s503 = scalar_lea.vmem [#allocation6], %s502
          %504 = dma.done %s500, 512
        $region56: #{tpu_custom_call.1} parent=47 // pred_fallthru
          _
        // Predicated region
        $region57: #{tpu_custom_call.1} parent=47 // pred_check
          %p505 = pneg %p168
        $region58: #{tpu_custom_call.1} parent=47 // pred_check_branch
          %507 = sbr.rel (%p505) target = $region60
        $region59: #{tpu_custom_call.1} parent=47 // pred_region
          %s508 = sand.u32 %s26, 1
          %s509 = scalar_lea.sflag [#allocation7], %s508
          %s510 = sand.u32 %s153, 1
          %s511 = smul.addr %s510, 32
          %s512 = scalar_lea.vmem [#allocation8], %s511
          %513 = dma.done %s509, 512
        $region60: #{tpu_custom_call.1} parent=47 // pred_fallthru
          _
      $region48: #{tpu_custom_call.1} parent=5 // pred_fallthru
        _
    $region6: #{tpu_custom_call.1} parent=1 // loop_footer
      %s24 = sadd.s32 1, %s20
    $region7: #{tpu_custom_call.1} parent=1 // loop_footer_branch
      %19 = sbr.rel target = $region3
    $region8: #{tpu_custom_call.1} parent=1 // loop_exit
      _
    %514 = vsyncpa [#allocation3], 1
    %s515 = scalar_lea.sflag [#allocation3], 1
    %516 = vsyncpa %s515, 1
    %517 = vsyncpa [#allocation4], 1
    %s518 = scalar_lea.sflag [#allocation4], 1
    %519 = vsyncpa %s518, 1
    %520 = vsyncpa [#allocation7], 1
    %s521 = scalar_lea.sflag [#allocation7], 1
    %522 = vsyncpa %s521, 1

</llo_original>
